<compile_context>
chip_gen: v6e
topology: v6e:2x2x1
jax: 0.10.0
libtpu: 0.0.40
codegen_flags: <defaults>
</compile_context>

<pallas_src>
import jax
import jax.numpy as jnp
from jax.experimental import pallas as pl
from jax.experimental.pallas import tpu as pltpu


def _channel_gain_kernel(x_ref, g_ref, o_ref):
    # x_ref: (TM, TS) in x.dtype, g_ref: (TM, 1) in f32.
    # Multiply in f32 (promotion), cast once on store.
    o_ref[...] = (x_ref[...] * g_ref[...]).astype(o_ref.dtype)


def _choose_ts(S, max_ts):
    """Lane tile: full S if it fits, else prefer a 128-aligned divisor of S."""
    if S <= max_ts:
        return S                                  # full-extent block is always legal
    top = (max_ts // 128) * 128
    for ts in range(top, 127, -128):              # divisor -> no partial column block
        if S % ts == 0:
            return ts
    return top                                    # fallback: one masked trailing block


def _choose_tm(rows, max_tm, align):
    """Sublane tile: full rows if it fits, else prefer an aligned divisor."""
    if rows <= max_tm:
        return rows                               # full-extent block is always legal
    top = (max_tm // align) * align
    for tm in range(top, align - 1, -align):
        if rows % tm == 0:
            return tm
    return top


def _ceil_to(v, a):
    return ((v + a - 1) // a) * a


def channel_gain_changer(x, key, training=True):
    """x: [B, C, S]. Returns x scaled by softmax'd random per-channel gains."""
    if not training:
        return x

    B, C, S = x.shape
    rows = B * C
    itemsize = jnp.dtype(x.dtype).itemsize

    # --- gains: uniform [0.5, 1.5) over channels, softmax over channel axis ---
    gains_raw = jax.random.uniform(key, (C,), dtype=jnp.float32) + 0.5
    gains = jax.nn.softmax(gains_raw)                            # (C,), f32
    row_gains = jnp.tile(gains, B).reshape(rows, 1)              # (B*C, 1), f32

    x2 = x.reshape(rows, S)

    # --- dtype-aware, byte-budgeted tile selection (~8 MiB of x per tile) ---
    TILE_BYTES = 8 * 1024 * 1024
    TM_CAP = 1024                                 # bounds the lane-padded gains block
    align = {4: 8, 2: 16, 1: 32}.get(itemsize, 8)
    elem_budget = TILE_BYTES // itemsize
    max_ts = max(128, elem_budget // TM_CAP)      # 2048 f32 / 4096 bf16 / 8192 int8
    TS = _choose_ts(S, max_ts)
    max_tm = max(align, min(TM_CAP, elem_budget // TS))
    TM = _choose_tm(rows, max_tm, align)

    # --- guarantee >=2 parallel blocks on non-trivial inputs (v7x megacore) ---
    if pl.cdiv(rows, TM) == 1 and pl.cdiv(S, TS) == 1 and rows * S * itemsize >= (1 << 20):
        half_rows = _ceil_to((rows + 1) // 2, align)
        half_s = _ceil_to((S + 1) // 2, 128)
        if half_rows < rows:
            TM = half_rows
        elif half_s < S:
            TS = half_s

    grid = (pl.cdiv(rows, TM), pl.cdiv(S, TS))    # row blocks outer, S blocks inner

    # --- VMEM budget: double-buffered in + out tiles + lane-padded gains block ---
    x_tile_bytes = TM * TS * itemsize
    g_tile_bytes = TM * 128 * 4                   # (TM,1) f32 pads to 128 lanes in VMEM
    needed = 2 * (2 * x_tile_bytes + g_tile_bytes) + (4 << 20)
    vmem_limit = int(min(max(needed, 24 << 20), 48 << 20))

    out = pl.pallas_call(
        _channel_gain_kernel,
        out_shape=jax.ShapeDtypeStruct((rows, S), x.dtype),
        grid_spec=pltpu.PrefetchScalarGridSpec(
            num_scalar_prefetch=0,
            grid=grid,
            in_specs=[
                pl.BlockSpec((TM, TS), lambda i, j: (i, j)),
                pl.BlockSpec((TM, 1), lambda i, j: (i, 0)),   # constant over inner j
            ],
            out_specs=pl.BlockSpec((TM, TS), lambda i, j: (i, j)),
        ),
        # Output may reuse x2's HBM buffer (effective when the caller donates x).
        input_output_aliases={0: 0},
        compiler_params=pltpu.CompilerParams(
            dimension_semantics=("parallel", "parallel"),
            vmem_limit_bytes=vmem_limit,
        ),
    )(x2, row_gains)

    return out.reshape(B, C, S)


def _reference(x, key):
    C = x.shape[1]
    gains_raw = jax.random.uniform(key, (C,), dtype=jnp.float32) + 0.5
    sm = jax.nn.softmax(gains_raw).reshape(1, C, 1)
    return (x.astype(jnp.float32) * sm).astype(x.dtype)


if __name__ == "__main__":
    root = jax.random.PRNGKey(0)
    k1, k2, k3, kg = jax.random.split(root, 4)

    # 1) Canonical small case: [B=2, C=4, S=128], f32 (single-tile grid).
    xa = jax.random.normal(k1, (2, 4, 128), dtype=jnp.float32)
    out_a = jax.block_until_ready(channel_gain_changer(xa, kg, training=True))
    assert jnp.allclose(out_a, _reference(xa, kg), atol=1e-6, rtol=1e-6), "f32 small mismatch"

    # 2) Multi-block grid with a partial (masked) trailing column block and a
    #    non-8-aligned full-extent row block: [3, 5, 4200], f32.
    xb = jax.random.normal(k2, (3, 5, 4200), dtype=jnp.float32)
    out_b = jax.block_until_ready(channel_gain_changer(xb, kg, training=True))
    assert jnp.allclose(out_b, _reference(xb, kg), atol=1e-6, rtol=1e-6), "f32 multiblock mismatch"

    # 3) bf16 path (f32 multiply inside the kernel, cast on store).
    xc = jax.random.normal(k3, (2, 4, 1024), dtype=jnp.bfloat16)
    out_c = jax.block_until_ready(channel_gain_changer(xc, kg, training=True))
    assert jnp.allclose(out_c.astype(jnp.float32),
                        _reference(xc, kg).astype(jnp.float32),
                        atol=1e-2, rtol=1e-2), "bf16 mismatch"

    # 4) Eval mode is identity.
    out_eval = jax.block_until_ready(channel_gain_changer(xa, kg, training=False))
    assert jnp.array_equal(out_eval, xa), "eval path not identity"

    print("KERNEL_OK")
</pallas_src>

<mosaic_0001>
module attributes {stable_mosaic.version = 11 : i64} {
  func.func @_channel_gain_kernel(%arg0: i32, %arg1: i32, %arg2: memref<8x128xf32, #tpu.memory_space<vmem>>, %arg3: memref<8x1xf32, #tpu.memory_space<vmem>>, %arg4: memref<8x128xf32, #tpu.memory_space<vmem>>) attributes {dimension_semantics = [#tpu.dimension_semantics<parallel>, #tpu.dimension_semantics<parallel>], iteration_bounds = array<i64: 1, 1>, scalar_prefetch = 0 : i64, scratch_operands = 0 : i64, tpu.core_type = #tpu.core_type<tc>, window_params = [{transform_indices = @transform_0, window_bounds = array<i64: 8, 128>}, {transform_indices = @transform_1, window_bounds = array<i64: 8, 1>}, {transform_indices = @transform_2, window_bounds = array<i64: 8, 128>}]} {
    %c0 = arith.constant 0 : index
    %c0_0 = arith.constant 0 : index
    %0 = vector.load %arg2[%c0, %c0_0] : memref<8x128xf32, #tpu.memory_space<vmem>>, vector<8x128xf32>
    %c0_1 = arith.constant 0 : index
    %c0_2 = arith.constant 0 : index
    %1 = vector.load %arg3[%c0_1, %c0_2] : memref<8x1xf32, #tpu.memory_space<vmem>>, vector<8x1xf32>
    %2 = vector.broadcast %1 : vector<8x1xf32> to vector<8x128xf32>
    %3 = arith.mulf %0, %2 : vector<8x128xf32>
    %c0_3 = arith.constant 0 : index
    %c0_4 = arith.constant 0 : index
    %4 = vector.load %arg4[%c0_3, %c0_4] : memref<8x128xf32, #tpu.memory_space<vmem>>, vector<8x128xf32>
    tpu.vector_store %arg4[%c0_3, %c0_4], %3 {strides = array<i32>} : memref<8x128xf32, #tpu.memory_space<vmem>>, vector<8x128xf32>,
    return
  }
  func.func @transform_0(%arg0: i32, %arg1: i32) -> (i32, i32) {
    %c0_i32 = arith.constant 0 : i32
    return %arg0, %arg1 : i32, i32
  }
  func.func @transform_1(%arg0: i32, %arg1: i32) -> (i32, i32) {
    %c0_i32 = arith.constant 0 : i32
    %c0_i32_0 = arith.constant 0 : i32
    return %arg0, %c0_i32 : i32, i32
  }
  func.func @transform_2(%arg0: i32, %arg1: i32) -> (i32, i32) {
    %c0_i32 = arith.constant 0 : i32
    return %arg0, %arg1 : i32, i32
  }
}

</mosaic_0001>

<llo_original>
// kernel: tpu_custom_call.1
$region0: #{tpu_custom_call.1}
  #allocation0 [shape = 'u32[]', space=smem, size = 0x4, offset = 0x4, fixed_abs, tag = 'smem constant byte address 0x4 - core index']
  #allocation1 [shape = 'u32[144,128]{1,0:T(1,128)}', space=vmem, size = 0x12000, scoped, tag = 'internal scratch']
  %s0 = inlined_call_operand.hbm [shape: f32[8,128], index: 0, kind: input, shape index: {}, may-alias: {0,2}]
  %s1 = inlined_call_operand.vmem [shape: f32[8,1], index: 1, kind: input, shape index: {}]
  %s2 = inlined_call_operand.hbm [shape: f32[8,128], index: 2, kind: output, shape index: {}, may-alias: {0,2}]
  %s3 = sld [smem:[#allocation0]]
  $region22: #{tpu_custom_call.1} parent=0
    _
  %s5 = ssub.s32 1, %s3
  %s6 = scalar_select 0, %s5, %s3
  $region1: #{tpu_custom_call.1} parent=0
    #allocation2 [shape = 'u8[4096]{0}', space=vmem, size = 0x1000, scoped, tag = 'input window, operand 0, single buffered']
    #allocation3 [shape = 's32[1]{0}', space=sflag, size = 0x4, scoped, tag = 'scoped memory for tpu_custom_call.1']
    #allocation4 [shape = 's32[1]{0}', space=sflag, size = 0x4, scoped, tag = 'scoped memory for tpu_custom_call.1']
    #allocation5 [shape = 'u8[4096]{0}', space=vmem, size = 0x1000, scoped, tag = 'output window, operand 0, single buffered']
    %7 = vsyncpa [#allocation3], 0
    %8 = vsyncpa [#allocation4], 0
    // Predicated region
    $region2: #{tpu_custom_call.1} parent=1 // pred_check
      _
    $region3: #{tpu_custom_call.1} parent=1 // pred_check_branch
      %10 = sbr.rel (0) target = $region5
    $region4: #{tpu_custom_call.1} parent=1 // pred_region
      %s12 = ssub.s32 128, 128
      %13 = vsyncadd [#allocation3], %s12
      %s15 = sshll.u32 [#allocation2], 4
      %s16 = int_to_ptr.vmem [resolvable:$true] %s15
      %18 = dma.hbm_to_vmem [thread:$0]  %s0, 128, %s16, [#allocation3]
    $region5: #{tpu_custom_call.1} parent=1 // pred_fallthru
      _
    // Predicated region
    $region6: #{tpu_custom_call.1} parent=1 // pred_check
      _
    $region7: #{tpu_custom_call.1} parent=1 // pred_check_branch
      %20 = sbr.rel (0) target = $region9
    $region8: #{tpu_custom_call.1} parent=1 // pred_region
      _
    $region9: #{tpu_custom_call.1} parent=1 // pred_fallthru
      _
    // Predicated region
    $region10: #{tpu_custom_call.1} parent=1 // pred_check
      _
    $region11: #{tpu_custom_call.1} parent=1 // pred_check_branch
      %22 = sbr.rel (0) target = $region13
    $region12: #{tpu_custom_call.1} parent=1 // pred_region
      %23 = dma.done [#allocation3], 128
    $region13: #{tpu_custom_call.1} parent=1 // pred_fallthru
      _
    %v24 = vld [vmem:[#allocation2] sm:$0xff]
    %v25 = vld [vmem:[%s1] sm:$0xff]
    %27 = vset.pattern.permute.xlu0 0
    %28 = vperm.xlu0 %27, %v25
    %v29 = vpop.permute.xlu0 %28
    %v31 = vmul.f32 %v24, %v29
    %32 = vst [vmem:[#allocation5] sm:$0xff] %v31
    // Predicated region
    $region14: #{tpu_custom_call.1} parent=1 // pred_check
      _
    $region15: #{tpu_custom_call.1} parent=1 // pred_check_branch
      %34 = sbr.rel (0) target = $region17
    $region16: #{tpu_custom_call.1} parent=1 // pred_region
      %s36 = ssub.s32 128, 128
      %37 = vsyncadd [#allocation4], %s36
      %s39 = sshll.u32 [#allocation5], 4
      %s40 = int_to_ptr.vmem [resolvable:$true] %s39
      %42 = dma.vmem_to_hbm [thread:$0]  %s40, 128, %s2, [#allocation4]
    $region17: #{tpu_custom_call.1} parent=1 // pred_fallthru
      _
    // Predicated region
    $region18: #{tpu_custom_call.1} parent=1 // pred_check
      _
    $region19: #{tpu_custom_call.1} parent=1 // pred_check_branch
      %44 = sbr.rel (0) target = $region21
    $region20: #{tpu_custom_call.1} parent=1 // pred_region
      %45 = dma.done [#allocation4], 128
    $region21: #{tpu_custom_call.1} parent=1 // pred_fallthru
      _
    %46 = vsyncpa [#allocation3], 1
    %47 = vsyncpa [#allocation4], 1

</llo_original>
